<compile_context>
chip_gen: v7x
topology: tpu7x:2x2x1
jax: 0.10.0
libtpu: 0.0.40
codegen_flags: <defaults>
</compile_context>

<pallas_src>
import jax
import jax.numpy as jnp
from jax import lax
from jax.experimental import pallas as pl
from jax.experimental.pallas import tpu as pltpu

_LANES = 128  # lane-dense output width


def attention_net_kernel(support_ref, labels_ref, target_ref, out_ref):
    # Per grid step (one batch element):
    #   support_ref: (1, K, D)  labels_ref: (1, K, C)  target_ref: (1, 1, D)
    #   out_ref:     (1, 1, _LANES) int32 — argmax broadcast across all lanes.
    support = support_ref[0]                     # (K, D) f32
    labels = labels_ref[0]                       # (K, C) f32
    target = target_ref[0]                       # (1, D) f32

    C = labels.shape[1]
    eps = jnp.float32(1e-12)                     # torch F.normalize default eps
    eps_sq = eps * eps                           # clamp sumsq so rsqrt never sees 0

    # L2-normalization scales via rsqrt (EUP):
    #   x * rsqrt(max(|x|^2, eps^2)) == x / max(|x|, eps)  (torch F.normalize).
    s_sumsq = jnp.sum(support * support, axis=1, keepdims=True)      # (K, 1)
    s_scale = lax.rsqrt(jnp.maximum(s_sumsq, eps_sq))                 # (K, 1)
    t_sumsq = jnp.sum(target * target, axis=1, keepdims=True)        # (1, 1)
    t_scale = lax.rsqrt(jnp.maximum(t_sumsq, eps_sq))                 # (1, 1)
    target_n = target * t_scale                                       # (1, D)

    # Cosine numerators on the MXU: (K, D) @ (D, 1) -> (K, 1), then scale by
    # the support rsqrt norms.  No repeated-target temporary, no XLU reduce.
    raw = jnp.dot(support, target_n.T, preferred_element_type=jnp.float32)  # (K, 1)
    sims = raw * s_scale                                                     # (K, 1)

    # exp of bounded cosine sims; no max-subtraction needed.
    e = jnp.exp(sims)                                                        # (K, 1)

    # Unnormalized label pdf: pdf_u[c] = sum_k e[k] * labels[k, c].
    # The softmax denominator is a positive per-batch scalar, so the argmax
    # below is invariant to it — normalization deleted entirely.
    pdf_u = jnp.sum(e * labels, axis=0, keepdims=True)                       # (1, C)

    # argmax over classes with first-index tie-break (matches torch.max).
    class_iota = lax.broadcasted_iota(jnp.int32, (1, C), 1)
    max_val = jnp.max(pdf_u, axis=1, keepdims=True)                          # (1, 1)
    pred = jnp.min(jnp.where(pdf_u == max_val, class_iota, jnp.int32(C)),
                   axis=1, keepdims=True)                                    # (1, 1) int32

    # Lane-dense store: broadcast the index across all 128 lanes (unmasked vst).
    out_ref[...] = jnp.broadcast_to(pred, out_ref.shape).astype(jnp.int32)


def attention_net_forward(support_sets, support_set_labels, target_images):
    B, K, D = support_sets.shape
    C = support_set_labels.shape[2]
    target3d = target_images.reshape(B, 1, D)    # cheap host-side reshape

    out_wide = pl.pallas_call(
        attention_net_kernel,
        out_shape=jax.ShapeDtypeStruct((B, 1, _LANES), jnp.int32),
        grid=(B,),
        in_specs=[
            pl.BlockSpec((1, K, D), lambda b: (b, 0, 0)),
            pl.BlockSpec((1, K, C), lambda b: (b, 0, 0)),
            pl.BlockSpec((1, 1, D), lambda b: (b, 0, 0)),
        ],
        out_specs=pl.BlockSpec((1, 1, _LANES), lambda b: (b, 0, 0)),
        compiler_params=pltpu.CompilerParams(
            dimension_semantics=("parallel",)),
    )(support_sets, support_set_labels, target3d)
    return out_wide[:, 0, :1]  # (B, 1) int32, same as torch.max(..., dim=2).indices


def reference_forward(support_sets, support_set_labels, target_images):
    # Pure-JAX reference mirroring the PyTorch module.
    eps = 1e-12
    s_n = support_sets / jnp.maximum(
        jnp.linalg.norm(support_sets, axis=2, keepdims=True), eps)
    t_n = target_images / jnp.maximum(
        jnp.linalg.norm(target_images, axis=1, keepdims=True), eps)
    sims = jnp.einsum('bkd,bd->bk', s_n, t_n)
    probs = jax.nn.softmax(sims, axis=1)
    pdf = jnp.einsum('bk,bkc->bc', probs, support_set_labels)
    return jnp.argmax(pdf, axis=1, keepdims=True).astype(jnp.int32)


if __name__ == "__main__":
    B, K, D, C = 2, 8, 32, 4
    key = jax.random.PRNGKey(0)
    k1, k2, k3 = jax.random.split(key, 3)

    support_sets = jax.random.normal(k1, (B, K, D), dtype=jnp.float32)
    target_images = jax.random.normal(k2, (B, D), dtype=jnp.float32)
    label_ids = jax.random.randint(k3, (B, K), 0, C)
    support_set_labels = jax.nn.one_hot(label_ids, C, dtype=jnp.float32)

    preds = attention_net_forward(support_sets, support_set_labels, target_images)
    preds = jax.block_until_ready(preds)

    ref = reference_forward(support_sets, support_set_labels, target_images)
    assert preds.shape == (B, 1), preds.shape
    assert preds.dtype == jnp.int32, preds.dtype
    assert jnp.array_equal(preds, ref), (preds, ref)

    print("KERNEL_OK")
</pallas_src>

<mosaic_0001>
module attributes {stable_mosaic.version = 11 : i64} {
  func.func @attention_net_kernel(%arg0: i32, %arg1: memref<1x8x32xf32, #tpu.memory_space<vmem>>, %arg2: memref<1x8x4xf32, #tpu.memory_space<vmem>>, %arg3: memref<1x1x32xf32, #tpu.memory_space<vmem>>, %arg4: memref<1x1x128xi32, #tpu.memory_space<vmem>>) attributes {dimension_semantics = [#tpu.dimension_semantics<parallel>], iteration_bounds = array<i64: 2>, scalar_prefetch = 0 : i64, scratch_operands = 0 : i64, tpu.core_type = #tpu.core_type<tc>, window_params = [{transform_indices = @transform_0, window_bounds = array<i64: 1, 8, 32>}, {transform_indices = @transform_1, window_bounds = array<i64: 1, 8, 4>}, {transform_indices = @transform_2, window_bounds = array<i64: 1, 1, 32>}, {transform_indices = @transform_3, window_bounds = array<i64: 1, 1, 128>}]} {
    %c0 = arith.constant 0 : index
    %c0_0 = arith.constant 0 : index
    %c0_1 = arith.constant 0 : index
    %0 = vector.load %arg1[%c0, %c0_0, %c0_1] : memref<1x8x32xf32, #tpu.memory_space<vmem>>, vector<1x8x32xf32>
    %1 = vector.shape_cast %0 : vector<1x8x32xf32> to vector<8x32xf32>
    %c0_2 = arith.constant 0 : index
    %c0_3 = arith.constant 0 : index
    %c0_4 = arith.constant 0 : index
    %2 = vector.load %arg2[%c0_2, %c0_3, %c0_4] : memref<1x8x4xf32, #tpu.memory_space<vmem>>, vector<1x8x4xf32>
    %3 = vector.shape_cast %2 : vector<1x8x4xf32> to vector<8x4xf32>
    %c0_5 = arith.constant 0 : index
    %c0_6 = arith.constant 0 : index
    %c0_7 = arith.constant 0 : index
    %4 = vector.load %arg3[%c0_5, %c0_6, %c0_7] : memref<1x1x32xf32, #tpu.memory_space<vmem>>, vector<1x1x32xf32>
    %5 = vector.shape_cast %4 : vector<1x1x32xf32> to vector<1x32xf32>
    %cst = arith.constant 9.99999996E-13 : f32
    %cst_8 = arith.constant 9.99999996E-13 : f32
    %6 = arith.mulf %cst, %cst_8 : f32
    %7 = arith.mulf %1, %1 : vector<8x32xf32>
    %cst_9 = arith.constant dense<0.000000e+00> : vector<8xf32>
    %8 = vector.multi_reduction <add>, %7, %cst_9 [1] : vector<8x32xf32> to vector<8xf32>
    %9 = vector.shape_cast %8 : vector<8xf32> to vector<8x1xf32>
    %10 = vector.broadcast %6 : f32 to vector<8x1xf32>
    %11 = arith.maximumf %9, %10 : vector<8x1xf32>
    %12 = math.rsqrt %11 : vector<8x1xf32>
    %13 = arith.mulf %5, %5 : vector<1x32xf32>
    %cst_10 = arith.constant dense<0.000000e+00> : vector<1xf32>
    %14 = vector.multi_reduction <add>, %13, %cst_10 [1] : vector<1x32xf32> to vector<1xf32>
    %15 = vector.shape_cast %14 : vector<1xf32> to vector<1x1xf32>
    %16 = vector.broadcast %6 : f32 to vector<1x1xf32>
    %17 = arith.maximumf %15, %16 : vector<1x1xf32>
    %18 = math.rsqrt %17 : vector<1x1xf32>
    %19 = vector.broadcast %18 : vector<1x1xf32> to vector<1x32xf32>
    %20 = arith.mulf %5, %19 : vector<1x32xf32>
    %21 = tpu.transpose %20, [1, 0] : vector<1x32xf32> -> vector<32x1xf32>
    %cst_11 = arith.constant dense<0.000000e+00> : vector<8x1xf32>
    %22 = tpu.matmul %1, %21, %cst_11 {dimension_numbers = #tpu.dot_dimension_numbers<[1], [0], [0], [1], [0, 0, 1, 1], [], []>} : vector<8x32xf32>, vector<32x1xf32>, vector<8x1xf32> -> vector<8x1xf32>
    %23 = arith.mulf %22, %12 : vector<8x1xf32>
    %24 = math.exp %23 : vector<8x1xf32>
    %25 = vector.broadcast %24 : vector<8x1xf32> to vector<8x4xf32>
    %26 = arith.mulf %25, %3 : vector<8x4xf32>
    %cst_12 = arith.constant dense<0.000000e+00> : vector<4xf32>
    %27 = vector.multi_reduction <add>, %26, %cst_12 [0] : vector<8x4xf32> to vector<4xf32>
    %28 = vector.shape_cast %27 : vector<4xf32> to vector<1x4xf32>
    %29 = tpu.iota {dimensions = array<i32: 1>} : vector<1x4xi32>
    %cst_13 = arith.constant dense<0xFF800000> : vector<1xf32>
    %30 = vector.multi_reduction <maximumf>, %28, %cst_13 [1] : vector<1x4xf32> to vector<1xf32>
    %31 = vector.shape_cast %30 : vector<1xf32> to vector<1x1xf32>
    %32 = vector.broadcast %31 : vector<1x1xf32> to vector<1x4xf32>
    %33 = arith.cmpf oeq, %28, %32 : vector<1x4xf32>
    %c4_i32 = arith.constant 4 : i32
    %34 = vector.broadcast %c4_i32 : i32 to vector<1x4xi32>
    %35 = arith.select %33, %29, %34 : vector<1x4xi1>, vector<1x4xi32>
    %cst_14 = arith.constant dense<2147483647> : vector<1xi32>
    %36 = vector.multi_reduction <minsi>, %35, %cst_14 [1] : vector<1x4xi32> to vector<1xi32>
    %37 = vector.shape_cast %36 : vector<1xi32> to vector<1x1xi32>
    %38 = vector.shape_cast %37 : vector<1x1xi32> to vector<1x1x1xi32>
    %39 = vector.broadcast %38 : vector<1x1x1xi32> to vector<1x1x128xi32>
    %c0_15 = arith.constant 0 : index
    %c0_16 = arith.constant 0 : index
    %c0_17 = arith.constant 0 : index
    %40 = vector.load %arg4[%c0_15, %c0_16, %c0_17] : memref<1x1x128xi32, #tpu.memory_space<vmem>>, vector<1x1x128xi32>
    tpu.vector_store %arg4[%c0_15, %c0_16, %c0_17], %39 {strides = array<i32>} : memref<1x1x128xi32, #tpu.memory_space<vmem>>, vector<1x1x128xi32>,
    return
  }
  func.func @transform_0(%arg0: i32) -> (i32, i32, i32) {
    %c0_i32 = arith.constant 0 : i32
    %c0_i32_0 = arith.constant 0 : i32
    %c0_i32_1 = arith.constant 0 : i32
    return %arg0, %c0_i32, %c0_i32_0 : i32, i32, i32
  }
  func.func @transform_1(%arg0: i32) -> (i32, i32, i32) {
    %c0_i32 = arith.constant 0 : i32
    %c0_i32_0 = arith.constant 0 : i32
    %c0_i32_1 = arith.constant 0 : i32
    return %arg0, %c0_i32, %c0_i32_0 : i32, i32, i32
  }
  func.func @transform_2(%arg0: i32) -> (i32, i32, i32) {
    %c0_i32 = arith.constant 0 : i32
    %c0_i32_0 = arith.constant 0 : i32
    %c0_i32_1 = arith.constant 0 : i32
    return %arg0, %c0_i32, %c0_i32_0 : i32, i32, i32
  }
  func.func @transform_3(%arg0: i32) -> (i32, i32, i32) {
    %c0_i32 = arith.constant 0 : i32
    %c0_i32_0 = arith.constant 0 : i32
    %c0_i32_1 = arith.constant 0 : i32
    return %arg0, %c0_i32, %c0_i32_0 : i32, i32, i32
  }
}

</mosaic_0001>

<llo_original>
// kernel: tpu_custom_call.1
$region0: #{tpu_custom_call.1}
  #allocation0 [shape = 'u32[]', space=smem, size = 0x4, offset = 0x4, fixed_abs, tag = 'smem constant byte address 0x4 - core index']
  #allocation1 [shape = 'u32[144,128]{1,0:T(1,128)}', space=vmem, size = 0x12000, scoped, tag = 'internal scratch']
  %s0 = inlined_call_operand.vmem [shape: f32[2,8,32], index: 0, kind: input, shape index: {}]
  %s1 = inlined_call_operand.vmem [shape: f32[2,8,4], index: 1, kind: input, shape index: {}]
  %s2 = inlined_call_operand.vmem [shape: f32[2,1,32], index: 2, kind: input, shape index: {}]
  %s3 = inlined_call_operand.hbm [shape: s32[2,1,128], index: 3, kind: output, shape index: {}]
  %s4 = sld [smem:[#allocation0]]
  $region45: #{tpu_custom_call.1} parent=0
    _
  %s6 = ssub.s32 1, %s4
  %s7 = scalar_select 0, %s6, %s4
  $region1: #{tpu_custom_call.1} parent=0
    #allocation2 [shape = 'u8[1024]{0}', space=vmem, size = 0x400, scoped, tag = 'output window, operand 0']
    #allocation3 [shape = 's32[2]{0}', space=sflag, size = 0x8, scoped, tag = 'scoped memory for tpu_custom_call.1']
    %8 = vsyncpa [#allocation3], 0
    %s9 = scalar_lea.sflag [#allocation3], 1
    %10 = vsyncpa %s9, 0
    loop: start=0, step=1, limit=4
    $region2: #{tpu_custom_call.1} parent=1 // loop_pre_header
      _
    $region3: #{tpu_custom_call.1} parent=1 // loop_header
      %s12 = sphi 0, %s16
      %p13 = scmp.ge.s32.totalorder %s12, 4
      %s22 = sphi 0, %s24
      %s25 = sphi 0, %s22
      %s26 = sphi 0, %s25
      %s42 = sphi 0, %s26
      %s48 = sphi 0, %s50
      %s51 = sphi 0, %s48
      %s52 = sphi 0, %s51
      %s68 = sphi 0, %s52
      %s74 = sphi 0, %s76
      %s77 = sphi 0, %s74
      %s78 = sphi 0, %s77
      %s94 = sphi 0, %s78
      %s100 = sphi 0, %s102
      %s103 = sphi 0, %s100
      %s104 = sphi 0, %s103
      %s120 = sphi 0, %s104
    $region4: #{tpu_custom_call.1} parent=1 // loop_header_branch
      %15 = sbr.rel (%p13) target = $region8
    $region5: #{tpu_custom_call.1} parent=1 // loop_body
      %s17 = ssub.s32 %s12, 1
      %s18 = ssub.s32 %s12, 2
      %s19 = sadd.s32 %s12, 1
      %s20 = ssub.s32 %s12, %s19
      %p21 = scmp.eq.s32.totalorder %s20, 0
      %s23 = sadd.s32 %s22, 1
      %s24 = scalar_select %p21, %s22, %s23
      %p27 = pneg %p21
      %p28 = scmp.eq.s32.totalorder %s12, 1
      %p29 = por %p27, %p28
      %p30 = scmp.ne.s32.totalorder %s22, %s25
      %p31 = scmp.eq.s32.totalorder %s12, 0
      %p32 = por %p30, %p31
      %p33 = scmp.ne.s32.totalorder %s22, %s25
      %p34 = scmp.eq.s32.totalorder %s17, 1
      %p35 = por %p33, %p34
      %p36 = scmp.ne.s32.totalorder %s25, %s26
      %p37 = scmp.eq.s32.totalorder %s17, 0
      %p38 = por %p36, %p37
      %p39 = scmp.ne.s32.totalorder %s25, %s26
      %p40 = scmp.eq.s32.totalorder %s18, 1
      %p41 = por %p39, %p40
      %p43 = scmp.ne.s32.totalorder %s26, %s42
      %p44 = scmp.eq.s32.totalorder %s18, 0
      %p45 = por %p43, %p44
      %s46 = ssub.s32 %s12, %s19
      %p47 = scmp.eq.s32.totalorder %s46, 0
      %s49 = sadd.s32 %s48, 1
      %s50 = scalar_select %p47, %s48, %s49
      %p53 = pneg %p47
      %p54 = scmp.eq.s32.totalorder %s12, 1
      %p55 = por %p53, %p54
      %p56 = scmp.ne.s32.totalorder %s48, %s51
      %p57 = scmp.eq.s32.totalorder %s12, 0
      %p58 = por %p56, %p57
      %p59 = scmp.ne.s32.totalorder %s48, %s51
      %p60 = scmp.eq.s32.totalorder %s17, 1
      %p61 = por %p59, %p60
      %p62 = scmp.ne.s32.totalorder %s51, %s52
      %p63 = scmp.eq.s32.totalorder %s17, 0
      %p64 = por %p62, %p63
      %p65 = scmp.ne.s32.totalorder %s51, %s52
      %p66 = scmp.eq.s32.totalorder %s18, 1
      %p67 = por %p65, %p66
      %p69 = scmp.ne.s32.totalorder %s52, %s68
      %p70 = scmp.eq.s32.totalorder %s18, 0
      %p71 = por %p69, %p70
      %s72 = ssub.s32 %s12, %s19
      %p73 = scmp.eq.s32.totalorder %s72, 0
      %s75 = sadd.s32 %s74, 1
      %s76 = scalar_select %p73, %s74, %s75
      %p79 = pneg %p73
      %p80 = scmp.eq.s32.totalorder %s12, 1
      %p81 = por %p79, %p80
      %p82 = scmp.ne.s32.totalorder %s74, %s77
      %p83 = scmp.eq.s32.totalorder %s12, 0
      %p84 = por %p82, %p83
      %p85 = scmp.ne.s32.totalorder %s74, %s77
      %p86 = scmp.eq.s32.totalorder %s17, 1
      %p87 = por %p85, %p86
      %p88 = scmp.ne.s32.totalorder %s77, %s78
      %p89 = scmp.eq.s32.totalorder %s17, 0
      %p90 = por %p88, %p89
      %p91 = scmp.ne.s32.totalorder %s77, %s78
      %p92 = scmp.eq.s32.totalorder %s18, 1
      %p93 = por %p91, %p92
      %p95 = scmp.ne.s32.totalorder %s78, %s94
      %p96 = scmp.eq.s32.totalorder %s18, 0
      %p97 = por %p95, %p96
      %s98 = ssub.s32 %s12, %s19
      %p99 = scmp.eq.s32.totalorder %s98, 0
      %s101 = sadd.s32 %s100, 1
      %s102 = scalar_select %p99, %s100, %s101
      %p105 = pneg %p99
      %p106 = scmp.eq.s32.totalorder %s12, 1
      %p107 = por %p105, %p106
      %p108 = scmp.ne.s32.totalorder %s100, %s103
      %p109 = scmp.eq.s32.totalorder %s12, 0
      %p110 = por %p108, %p109
      %p111 = scmp.ne.s32.totalorder %s100, %s103
      %p112 = scmp.eq.s32.totalorder %s17, 1
      %p113 = por %p111, %p112
      %p114 = scmp.ne.s32.totalorder %s103, %s104
      %p115 = scmp.eq.s32.totalorder %s17, 0
      %p116 = por %p114, %p115
      %p117 = scmp.ne.s32.totalorder %s103, %s104
      %p118 = scmp.eq.s32.totalorder %s18, 1
      %p119 = por %p117, %p118
      %p121 = scmp.ne.s32.totalorder %s104, %s120
      %p122 = scmp.eq.s32.totalorder %s18, 0
      %p123 = por %p121, %p122
      %p124 = scmp.le.s32.totalorder 1, %s12
      %p125 = scmp.lt.s32.totalorder %s12, 3
      %p126 = pnand %p124, %p125
      %p127 = pneg %p126
      // Predicated region
      $region9: #{tpu_custom_call.1} parent=5 // pred_check
        _
      $region10: #{tpu_custom_call.1} parent=5 // pred_check_branch
        %129 = sbr.rel (%p126) target = $region12
      $region11: #{tpu_custom_call.1} parent=5 // pred_region
        %s130 = ssub.s32 %s12, 1
      $region12: #{tpu_custom_call.1} parent=5 // pred_fallthru
        _
      %p131 = scmp.lt.s32.totalorder %s12, 2
      // Predicated region
      $region13: #{tpu_custom_call.1} parent=5 // pred_check
        %p132 = pneg %p131
      $region14: #{tpu_custom_call.1} parent=5 // pred_check_branch
        %134 = sbr.rel (%p132) target = $region16
      $region15: #{tpu_custom_call.1} parent=5 // pred_region
        // Predicated region
        $region17: #{tpu_custom_call.1} parent=15 // pred_check
          %p135 = pneg %p32
        $region18: #{tpu_custom_call.1} parent=15 // pred_check_branch
          %137 = sbr.rel (%p135) target = $region20
        $region19: #{tpu_custom_call.1} parent=15 // pred_region
          %p138 = scmp.lt.s32.totalorder %s12, 1
          %s139 = scalar_select %p138, %s12, 1
          %s140 = smul.addr %s139, 8
          %s141 = scalar_lea.vmem %s0, %s140
        $region20: #{tpu_custom_call.1} parent=15 // pred_fallthru
          _
        // Predicated region
        $region21: #{tpu_custom_call.1} parent=15 // pred_check
          %p142 = pneg %p58
        $region22: #{tpu_custom_call.1} parent=15 // pred_check_branch
          %144 = sbr.rel (%p142) target = $region24
        $region23: #{tpu_custom_call.1} parent=15 // pred_region
          %p145 = scmp.lt.s32.totalorder %s12, 1
          %s146 = scalar_select %p145, %s12, 1
          %s147 = smul.addr %s146, 8
          %s148 = scalar_lea.vmem %s1, %s147
        $region24: #{tpu_custom_call.1} parent=15 // pred_fallthru
          _
        // Predicated region
        $region25: #{tpu_custom_call.1} parent=15 // pred_check
          %p149 = pneg %p84
        $region26: #{tpu_custom_call.1} parent=15 // pred_check_branch
          %151 = sbr.rel (%p149) target = $region28
        $region27: #{tpu_custom_call.1} parent=15 // pred_region
          %p152 = scmp.lt.s32.totalorder %s12, 1
          %s153 = scalar_select %p152, %s12, 1
          %s154 = scalar_lea.vmem %s2, %s153
        $region28: #{tpu_custom_call.1} parent=15 // pred_fallthru
          _
      $region16: #{tpu_custom_call.1} parent=5 // pred_fallthru
        _
      %p155 = scmp.le.s32.totalorder 1, %s12
      %p156 = scmp.lt.s32.totalorder %s12, 3
      %p157 = pnand %p155, %p156
      %p158 = pneg %p157
      // Predicated region
      $region29: #{tpu_custom_call.1} parent=5 // pred_check
        _
      $region30: #{tpu_custom_call.1} parent=5 // pred_check_branch
        %160 = sbr.rel (%p157) target = $region32
      $region31: #{tpu_custom_call.1} parent=5 // pred_region
        %s161 = ssub.s32 %s12, 1
        %p162 = scmp.lt.s32.totalorder %s17, 1
        %s163 = scalar_select %p162, %s17, 1
        %s164 = smul.addr %s163, 8
        %s165 = scalar_lea.vmem %s0, %s164
        %p166 = pneg %p38
        %p167 = pneg %p35
        %p168 = scmp.lt.s32.totalorder %s17, 1
        %s169 = scalar_select %p168, %s17, 1
        %s170 = smul.addr %s169, 8
        %s171 = scalar_lea.vmem %s1, %s170
        %p172 = pneg %p64
        %p173 = pneg %p61
        %p174 = scmp.lt.s32.totalorder %s17, 1
        %s175 = scalar_select %p174, %s17, 1
        %s176 = scalar_lea.vmem %s2, %s175
        %p177 = pneg %p90
        %p178 = pneg %p87
        %p179 = pneg %p116
        %p180 = pneg %p113
        %s181 = sand.u32 %s103, 1
        %s182 = scalar_lea.sflag [#allocation3], %s181
        %s183 = sand.u32 %s103, 1
        %s184 = scalar_lea.vmem [#allocation2], %s183
        %p185 = scmp.lt.s32.totalorder %s17, 1
        %s186 = scalar_select %p185, %s17, 1
        %s187 = smul.addr %s186, 8
        %s188 = scalar_lea.vmem %s0, %s187
        %p189 = scmp.lt.s32.totalorder %s17, 1
        %s190 = scalar_select %p189, %s17, 1
        %s191 = smul.addr %s190, 8
        %s192 = scalar_lea.vmem %s1, %s191
        %p193 = scmp.lt.s32.totalorder %s17, 1
        %s194 = scalar_select %p193, %s17, 1
        %s195 = scalar_lea.vmem %s2, %s194
        %v196 = vld [vmem:[%s188] sm:$0xff]
        %v197 = vld [vmem:[%s192] sm:$0xff]
        %v198 = vld [vmem:[%s195] sm:$0x1]
        %v199 = vmul.f32 %v196, %v196
        %vm200 = vcmask 261120
        %v201 = vsel %vm200, %v199, 0.0
        %202 = vadd.xlane.f32.xlu0 %v201
        %v203 = vpop.xlane.xlu0 %202
        %v204 = vmax.f32 %v203, 1e-24
        %v205 = vrsqrt.pop %v204
        %v206 = vmul.f32 %v198, %v198
        %vm207 = vcmask 253952
        %v208 = vsel %vm207, %v206, 0.0
        %209 = vadd.xlane.f32.xlu0 %v208
        %v210 = vpop.xlane.xlu0 %209
        %v211 = vmax.f32 %v210, 1e-24
        %v212 = vrsqrt.pop %v211
        %v213 = vmul.f32 %v198, %v212
        %v215 = vlaneseq
        %v216 = vshrl.u32 %v215, 7
        %v217 = vsub.s32 0, %v216
        %v218 = vrot.slane %v213, %v217
        %v220 = vmul.f32 %v196, %v218
        %v221 = vsel %vm200, %v220, 0.0
        %222 = vadd.xlane.f32.xlu0 %v221
        %v223 = vpop.xlane.xlu0 %222
        %v224 = vmul.f32 %v223, %v205
        %v225 = vmul.f32 %v224, 1.442695
        %v226 = vpow.pop %v225
        %v227 = vmul.f32 %v226, %v197
        %vm228 = vcmask 31744
        %v229 = vsel %vm228, %v227, 0.0
        %v230 = vrot.slane %v229, 4
        %v231 = vadd.f32 %v229, %v230
        %v232 = vrot.slane %v231, 2
        %v233 = vadd.f32 %v231, %v232
        %v234 = vrot.slane %v233, 1
        %v235 = vadd.f32 %v233, %v234
        %v236 = vlaneseq
        %v237 = vand.u32 %v236, 127
        %v238 = vsel %vm228, %v235, -inf
        %239 = vmax.xlane.f32.xlu0 %v238
        %v240 = vpop.xlane.xlu0 %239
        %vm241 = vcmp.eq.f32.partialorder %v235, %v240
        %v242 = vsel %vm241, %v237, 4
        %v243 = vsel %vm228, %v242, 2147483647
        %v244 = vand.u32 %v243, 65535
        %v245 = vshra.s32 %v243, 16
        %v246 = vcvt.s32.f32 %v244
        %v247 = vcvt.s32.f32 %v245
        %248 = vmin.xlane.f32.xlu0 %v247
        %v249 = vpop.xlane.xlu0 %248
        %vm250 = vcmp.eq.f32.partialorder %v247, %v249
        %v251 = vsel %vm250, %v246, inf
        %252 = vmin.xlane.f32.xlu0 %v251
        %v253 = vpop.xlane.xlu0 %252
        %v254 = vcvt.f32.s32 %v253
        %v255 = vcvt.f32.s32 %v249
        %v256 = vshll.u32 %v255, 16
        %v257 = vadd.s32 %v256, %v254
        %258 = vst [vmem:[%s184] sm:$0x1] %v257
        %s259 = sand.u32 %s103, 1
        %s260 = scalar_lea.sflag [#allocation3], %s259
        %s261 = sand.u32 %s103, 1
        %s262 = scalar_lea.vmem [#allocation2], %s261
        // Predicated region
        $region33: #{tpu_custom_call.1} parent=31 // pred_check
          %p263 = pneg %p113
        $region34: #{tpu_custom_call.1} parent=31 // pred_check_branch
          %265 = sbr.rel (%p263) target = $region36
        $region35: #{tpu_custom_call.1} parent=31 // pred_region
          %s267 = ssub.s32 16, 16
          %268 = vsyncadd %s260, %s267
          %s269 = smul.addr %s17, 16
          %s270 = scalar_lea.hbm %s3, %s269
          %s272 = sshll.u32 %s262, 4
          %s273 = int_to_ptr.vmem [resolvable:$true] %s272
          %275 = dma.vmem_to_hbm [thread:$0]  %s273, 16, %s270, %s260
        $region36: #{tpu_custom_call.1} parent=31 // pred_fallthru
          _
      $region32: #{tpu_custom_call.1} parent=5 // pred_fallthru
        _
      %p276 = scmp.le.s32.totalorder 2, %s12
      // Predicated region
      $region37: #{tpu_custom_call.1} parent=5 // pred_check
        %p277 = pneg %p276
      $region38: #{tpu_custom_call.1} parent=5 // pred_check_branch
        %279 = sbr.rel (%p277) target = $region40
      $region39: #{tpu_custom_call.1} parent=5 // pred_region
        %s280 = ssub.s32 %s12, 2
        // Predicated region
        $region41: #{tpu_custom_call.1} parent=39 // pred_check
          %p281 = pneg %p119
        $region42: #{tpu_custom_call.1} parent=39 // pred_check_branch
          %283 = sbr.rel (%p281) target = $region44
        $region43: #{tpu_custom_call.1} parent=39 // pred_region
          %s284 = sand.u32 %s104, 1
          %s285 = scalar_lea.sflag [#allocation3], %s284
          %s286 = sand.u32 %s104, 1
          %s287 = scalar_lea.vmem [#allocation2], %s286
          %288 = dma.done %s285, 16
        $region44: #{tpu_custom_call.1} parent=39 // pred_fallthru
          _
      $region40: #{tpu_custom_call.1} parent=5 // pred_fallthru
        _
    $region6: #{tpu_custom_call.1} parent=1 // loop_footer
      %s16 = sadd.s32 1, %s12
    $region7: #{tpu_custom_call.1} parent=1 // loop_footer_branch
      %11 = sbr.rel target = $region3
    $region8: #{tpu_custom_call.1} parent=1 // loop_exit
      _
    %289 = vsyncpa [#allocation3], 1
    %s290 = scalar_lea.sflag [#allocation3], 1
    %291 = vsyncpa %s290, 1

</llo_original>
